<compile_context>
chip_gen: v5e
topology: v5e:2x2
jax: 0.10.0
libtpu: 0.0.40
codegen_flags: <defaults>
</compile_context>

<pallas_src>
import functools

import jax
import jax.numpy as jnp
from jax.experimental import pallas as pl
from jax.experimental.pallas import tpu as pltpu


def _round_up(x, m):
    return ((x + m - 1) // m) * m


def _mlp4_kernel(x_ref, w1_ref, b1_ref, w2_ref, b2_ref,
                 w3_ref, b3_ref, w4_ref, b4_ref, o_ref):
    """Four fused layers. Weights arrive pre-cast to bf16; matmuls run on the
    MXU with f32 accumulation; bias add + ReLU stay in f32 on the VPU."""
    bf16 = jnp.bfloat16
    # layer 1: relu(x @ W1 + b1)   (K = n_features, no contraction padding)
    h = jnp.dot(x_ref[...].astype(bf16), w1_ref[...],
                preferred_element_type=jnp.float32)
    h = jnp.maximum(h + b1_ref[...], 0.0)
    # layer 2: relu(h @ W2 + b2)
    h = jnp.dot(h.astype(bf16), w2_ref[...], preferred_element_type=jnp.float32)
    h = jnp.maximum(h + b2_ref[...], 0.0)
    # layer 3: relu(h @ W3 + b3)
    h = jnp.dot(h.astype(bf16), w3_ref[...], preferred_element_type=jnp.float32)
    h = jnp.maximum(h + b3_ref[...], 0.0)
    # output layer (lane-padded to 128 -> unmasked full-width store)
    o = jnp.dot(h.astype(bf16), w4_ref[...], preferred_element_type=jnp.float32)
    o_ref[...] = (o + b4_ref[...]).astype(o_ref.dtype)


def prepare_params(params):
    """One-time parameter prep (hoisted out of the forward path):
       * fc weight/bias zero-padded to a 128-lane output (lane-dense store),
       * weights cast to bf16 (MXU inputs); biases kept f32.
    Returns (prepped_params, n_classes)."""
    w1, b1, w2, b2, w3, b3, w4, b4 = params
    H = w1.shape[1]
    C = w4.shape[1]
    C_pad = _round_up(C, 128)
    w4p = jnp.zeros((H, C_pad), w4.dtype).at[:, :C].set(w4)
    b4p = jnp.zeros((1, C_pad), b4.dtype).at[:, :C].set(b4)
    bf16 = jnp.bfloat16
    prepped = (w1.astype(bf16), b1.astype(jnp.float32),
               w2.astype(bf16), b2.astype(jnp.float32),
               w3.astype(bf16), b3.astype(jnp.float32),
               w4p.astype(bf16), b4p.astype(jnp.float32))
    return prepped, C


def _pick_tb(B):
    # Tiny batches: one latency-bound grid step.
    if B <= 128:
        return _round_up(max(B, 8), 8)
    # Mid/large batches: >= 2 steps so the "parallel" batch axis shards across
    # both v7x TensorCores; cap at 512 to amortize the per-step overhead while
    # keeping double-buffered x/out tiles + resident weights at a few MB.
    return max(128, min(512, _round_up((B + 1) // 2, 8)))


@functools.partial(jax.jit, static_argnames=("n_classes", "tb"))
def mlp_forward(x, prepped_params, *, n_classes, tb=None):
    """LargeMLP forward. x: (B, F) f32; prepped_params from prepare_params()
    (weights pre-transposed to [in, out], fc lane-padded, bf16). -> (B, C)."""
    w1, b1, w2, b2, w3, b3, w4, b4 = prepped_params
    B, F_ = x.shape
    H = w1.shape[1]
    C_pad = w4.shape[1]
    out_dtype = x.dtype

    if tb is None:
        tb = _pick_tb(B)
    B_pad = _round_up(B, tb)

    # Only batch padding remains (exact: padded rows are sliced off below).
    xp = x if B_pad == B else jnp.zeros((B_pad, F_), x.dtype).at[:B, :].set(x)

    grid = (B_pad // tb,)

    flops = 2 * B_pad * (F_ * H + H * H + H * H + H * C_pad)
    bytes_accessed = (xp.size * xp.dtype.itemsize
                      + sum(a.size * a.dtype.itemsize
                            for a in (w1, w2, w3, w4, b1, b2, b3, b4))
                      + B_pad * C_pad * 4)

    # NOTE: weight/bias blocks are grid-invariant; pipeline_mode=pl.Buffered(1)
    # could drop their second buffer, but VMEM is not a constraint here
    # (~few MB total), so default double-buffering is left alone.
    out = pl.pallas_call(
        _mlp4_kernel,
        out_shape=jax.ShapeDtypeStruct((B_pad, C_pad), out_dtype),
        grid_spec=pltpu.PrefetchScalarGridSpec(
            num_scalar_prefetch=0,
            grid=grid,
            in_specs=[
                pl.BlockSpec((tb, F_), lambda i: (i, 0)),     # x batch tile (f32)
                pl.BlockSpec((F_, H), lambda i: (0, 0)),      # W1 (bf16, resident)
                pl.BlockSpec((1, H), lambda i: (0, 0)),       # b1 (f32)
                pl.BlockSpec((H, H), lambda i: (0, 0)),       # W2 (bf16, resident)
                pl.BlockSpec((1, H), lambda i: (0, 0)),       # b2 (f32)
                pl.BlockSpec((H, H), lambda i: (0, 0)),       # W3 (bf16, resident)
                pl.BlockSpec((1, H), lambda i: (0, 0)),       # b3 (f32)
                pl.BlockSpec((H, C_pad), lambda i: (0, 0)),   # W_fc (bf16, lane-padded)
                pl.BlockSpec((1, C_pad), lambda i: (0, 0)),   # b_fc (f32, lane-padded)
            ],
            out_specs=pl.BlockSpec((tb, C_pad), lambda i: (i, 0)),
        ),
        compiler_params=pltpu.CompilerParams(
            dimension_semantics=("parallel",),
        ),
        cost_estimate=pl.CostEstimate(
            flops=flops, transcendentals=0, bytes_accessed=bytes_accessed),
    )(xp, w1, b1, w2, b2, w3, b3, w4, b4)

    return out[:B, :n_classes]


def mlp_reference(x, params):
    w1, b1, w2, b2, w3, b3, w4, b4 = params
    h = jnp.maximum(x @ w1 + b1, 0.0)
    h = jnp.maximum(h @ w2 + b2, 0.0)
    h = jnp.maximum(h @ w3 + b3, 0.0)
    return h @ w4 + b4


if __name__ == "__main__":
    # Module config: n_features = (32,), hidden = 256 (x3), n_classes = 10.
    B, F_, H, C = 16, 32, 256, 10

    key = jax.random.PRNGKey(0)
    keys = jax.random.split(key, 9)
    x = jax.random.normal(keys[0], (B, F_), dtype=jnp.float32)

    def linear_init(kw, kb, fan_in, fan_out):
        # Matches nn.Linear's fan-in uniform init; weights stored [in, out].
        bound = 1.0 / (fan_in ** 0.5)
        w = jax.random.uniform(kw, (fan_in, fan_out), jnp.float32, -bound, bound)
        b = jax.random.uniform(kb, (1, fan_out), jnp.float32, -bound, bound)
        return w, b

    w1, b1 = linear_init(keys[1], keys[2], F_, H)   # hidden
    w2, b2 = linear_init(keys[3], keys[4], H, H)    # hidden2
    w3, b3 = linear_init(keys[5], keys[6], H, H)    # hidden3
    w4, b4 = linear_init(keys[7], keys[8], H, C)    # fc
    params = (w1, b1, w2, b2, w3, b3, w4, b4)

    # One-time parameter prep (lane padding + bf16 cast), outside forward path.
    prepped, n_classes = prepare_params(params)

    out = jax.block_until_ready(mlp_forward(x, prepped, n_classes=n_classes))

    ref = mlp_reference(x, params)
    assert out.shape == (B, C)
    # bf16 MXU matmuls (f32 accumulation): tolerance relaxed vs f32 reference.
    assert jnp.allclose(out, ref, atol=2e-2, rtol=2e-2), (
        float(jnp.max(jnp.abs(out - ref))))

    print("KERNEL_OK")
</pallas_src>

<mosaic_0001>
module attributes {stable_mosaic.version = 11 : i64} {
  func.func @_mlp4_kernel(%arg0: i32, %arg1: memref<16x32xf32, #tpu.memory_space<vmem>>, %arg2: memref<32x256xbf16, #tpu.memory_space<vmem>>, %arg3: memref<1x256xf32, #tpu.memory_space<vmem>>, %arg4: memref<256x256xbf16, #tpu.memory_space<vmem>>, %arg5: memref<1x256xf32, #tpu.memory_space<vmem>>, %arg6: memref<256x256xbf16, #tpu.memory_space<vmem>>, %arg7: memref<1x256xf32, #tpu.memory_space<vmem>>, %arg8: memref<256x128xbf16, #tpu.memory_space<vmem>>, %arg9: memref<1x128xf32, #tpu.memory_space<vmem>>, %arg10: memref<16x128xf32, #tpu.memory_space<vmem>>) attributes {dimension_semantics = [#tpu.dimension_semantics<parallel>], iteration_bounds = array<i64: 1>, scalar_prefetch = 0 : i64, scratch_operands = 0 : i64, tpu.core_type = #tpu.core_type<tc>, window_params = [{transform_indices = @transform_0, window_bounds = array<i64: 16, 32>}, {pipeline_mode = #tpu.pipeline_mode<synchronous>, transform_indices = @transform_1, window_bounds = array<i64: 32, 256>}, {pipeline_mode = #tpu.pipeline_mode<synchronous>, transform_indices = @transform_2, window_bounds = array<i64: 1, 256>}, {pipeline_mode = #tpu.pipeline_mode<synchronous>, transform_indices = @transform_3, window_bounds = array<i64: 256, 256>}, {pipeline_mode = #tpu.pipeline_mode<synchronous>, transform_indices = @transform_4, window_bounds = array<i64: 1, 256>}, {pipeline_mode = #tpu.pipeline_mode<synchronous>, transform_indices = @transform_5, window_bounds = array<i64: 256, 256>}, {pipeline_mode = #tpu.pipeline_mode<synchronous>, transform_indices = @transform_6, window_bounds = array<i64: 1, 256>}, {pipeline_mode = #tpu.pipeline_mode<synchronous>, transform_indices = @transform_7, window_bounds = array<i64: 256, 128>}, {pipeline_mode = #tpu.pipeline_mode<synchronous>, transform_indices = @transform_8, window_bounds = array<i64: 1, 128>}, {transform_indices = @transform_9, window_bounds = array<i64: 16, 128>}]} {
    %c0 = arith.constant 0 : index
    %c0_0 = arith.constant 0 : index
    %0 = vector.load %arg1[%c0, %c0_0] : memref<16x32xf32, #tpu.memory_space<vmem>>, vector<16x32xf32>
    %1 = arith.truncf %0 : vector<16x32xf32> to vector<16x32xbf16>
    %c0_1 = arith.constant 0 : index
    %c0_2 = arith.constant 0 : index
    %2 = vector.load %arg2[%c0_1, %c0_2] : memref<32x256xbf16, #tpu.memory_space<vmem>>, vector<32x256xbf16>
    %cst = arith.constant dense<0.000000e+00> : vector<16x256xf32>
    %3 = tpu.matmul %1, %2, %cst {dimension_numbers = #tpu.dot_dimension_numbers<[1], [0], [0], [1], [0, 0, 1, 1], [], []>} : vector<16x32xbf16>, vector<32x256xbf16>, vector<16x256xf32> -> vector<16x256xf32>
    %c0_3 = arith.constant 0 : index
    %c0_4 = arith.constant 0 : index
    %4 = vector.load %arg3[%c0_3, %c0_4] : memref<1x256xf32, #tpu.memory_space<vmem>>, vector<1x256xf32>
    %5 = vector.broadcast %4 : vector<1x256xf32> to vector<16x256xf32>
    %6 = arith.addf %3, %5 : vector<16x256xf32>
    %cst_5 = arith.constant 0.000000e+00 : f32
    %7 = vector.broadcast %cst_5 : f32 to vector<16x256xf32>
    %8 = arith.maximumf %6, %7 : vector<16x256xf32>
    %9 = arith.truncf %8 : vector<16x256xf32> to vector<16x256xbf16>
    %c0_6 = arith.constant 0 : index
    %c0_7 = arith.constant 0 : index
    %10 = vector.load %arg4[%c0_6, %c0_7] : memref<256x256xbf16, #tpu.memory_space<vmem>>, vector<256x256xbf16>
    %cst_8 = arith.constant dense<0.000000e+00> : vector<16x256xf32>
    %11 = tpu.matmul %9, %10, %cst_8 {dimension_numbers = #tpu.dot_dimension_numbers<[1], [0], [0], [1], [0, 0, 1, 1], [], []>} : vector<16x256xbf16>, vector<256x256xbf16>, vector<16x256xf32> -> vector<16x256xf32>
    %c0_9 = arith.constant 0 : index
    %c0_10 = arith.constant 0 : index
    %12 = vector.load %arg5[%c0_9, %c0_10] : memref<1x256xf32, #tpu.memory_space<vmem>>, vector<1x256xf32>
    %13 = vector.broadcast %12 : vector<1x256xf32> to vector<16x256xf32>
    %14 = arith.addf %11, %13 : vector<16x256xf32>
    %cst_11 = arith.constant 0.000000e+00 : f32
    %15 = vector.broadcast %cst_11 : f32 to vector<16x256xf32>
    %16 = arith.maximumf %14, %15 : vector<16x256xf32>
    %17 = arith.truncf %16 : vector<16x256xf32> to vector<16x256xbf16>
    %c0_12 = arith.constant 0 : index
    %c0_13 = arith.constant 0 : index
    %18 = vector.load %arg6[%c0_12, %c0_13] : memref<256x256xbf16, #tpu.memory_space<vmem>>, vector<256x256xbf16>
    %cst_14 = arith.constant dense<0.000000e+00> : vector<16x256xf32>
    %19 = tpu.matmul %17, %18, %cst_14 {dimension_numbers = #tpu.dot_dimension_numbers<[1], [0], [0], [1], [0, 0, 1, 1], [], []>} : vector<16x256xbf16>, vector<256x256xbf16>, vector<16x256xf32> -> vector<16x256xf32>
    %c0_15 = arith.constant 0 : index
    %c0_16 = arith.constant 0 : index
    %20 = vector.load %arg7[%c0_15, %c0_16] : memref<1x256xf32, #tpu.memory_space<vmem>>, vector<1x256xf32>
    %21 = vector.broadcast %20 : vector<1x256xf32> to vector<16x256xf32>
    %22 = arith.addf %19, %21 : vector<16x256xf32>
    %cst_17 = arith.constant 0.000000e+00 : f32
    %23 = vector.broadcast %cst_17 : f32 to vector<16x256xf32>
    %24 = arith.maximumf %22, %23 : vector<16x256xf32>
    %25 = arith.truncf %24 : vector<16x256xf32> to vector<16x256xbf16>
    %c0_18 = arith.constant 0 : index
    %c0_19 = arith.constant 0 : index
    %26 = vector.load %arg8[%c0_18, %c0_19] : memref<256x128xbf16, #tpu.memory_space<vmem>>, vector<256x128xbf16>
    %cst_20 = arith.constant dense<0.000000e+00> : vector<16x128xf32>
    %27 = tpu.matmul %25, %26, %cst_20 {dimension_numbers = #tpu.dot_dimension_numbers<[1], [0], [0], [1], [0, 0, 1, 1], [], []>} : vector<16x256xbf16>, vector<256x128xbf16>, vector<16x128xf32> -> vector<16x128xf32>
    %c0_21 = arith.constant 0 : index
    %c0_22 = arith.constant 0 : index
    %28 = vector.load %arg9[%c0_21, %c0_22] : memref<1x128xf32, #tpu.memory_space<vmem>>, vector<1x128xf32>
    %29 = vector.broadcast %28 : vector<1x128xf32> to vector<16x128xf32>
    %30 = arith.addf %27, %29 : vector<16x128xf32>
    %c0_23 = arith.constant 0 : index
    %c0_24 = arith.constant 0 : index
    %31 = vector.load %arg10[%c0_23, %c0_24] : memref<16x128xf32, #tpu.memory_space<vmem>>, vector<16x128xf32>
    tpu.vector_store %arg10[%c0_23, %c0_24], %30 {strides = array<i32>} : memref<16x128xf32, #tpu.memory_space<vmem>>, vector<16x128xf32>,
    return
  }
  func.func @transform_0(%arg0: i32) -> (i32, i32) {
    %c0_i32 = arith.constant 0 : i32
    %c0_i32_0 = arith.constant 0 : i32
    return %arg0, %c0_i32 : i32, i32
  }
  func.func @transform_1(%arg0: i32) -> (i32, i32) {
    %c0_i32 = arith.constant 0 : i32
    %c0_i32_0 = arith.constant 0 : i32
    %c0_i32_1 = arith.constant 0 : i32
    return %c0_i32, %c0_i32_0 : i32, i32
  }
  func.func @transform_2(%arg0: i32) -> (i32, i32) {
    %c0_i32 = arith.constant 0 : i32
    %c0_i32_0 = arith.constant 0 : i32
    %c0_i32_1 = arith.constant 0 : i32
    return %c0_i32, %c0_i32_0 : i32, i32
  }
  func.func @transform_3(%arg0: i32) -> (i32, i32) {
    %c0_i32 = arith.constant 0 : i32
    %c0_i32_0 = arith.constant 0 : i32
    %c0_i32_1 = arith.constant 0 : i32
    return %c0_i32, %c0_i32_0 : i32, i32
  }
  func.func @transform_4(%arg0: i32) -> (i32, i32) {
    %c0_i32 = arith.constant 0 : i32
    %c0_i32_0 = arith.constant 0 : i32
    %c0_i32_1 = arith.constant 0 : i32
    return %c0_i32, %c0_i32_0 : i32, i32
  }
  func.func @transform_5(%arg0: i32) -> (i32, i32) {
    %c0_i32 = arith.constant 0 : i32
    %c0_i32_0 = arith.constant 0 : i32
    %c0_i32_1 = arith.constant 0 : i32
    return %c0_i32, %c0_i32_0 : i32, i32
  }
  func.func @transform_6(%arg0: i32) -> (i32, i32) {
    %c0_i32 = arith.constant 0 : i32
    %c0_i32_0 = arith.constant 0 : i32
    %c0_i32_1 = arith.constant 0 : i32
    return %c0_i32, %c0_i32_0 : i32, i32
  }
  func.func @transform_7(%arg0: i32) -> (i32, i32) {
    %c0_i32 = arith.constant 0 : i32
    %c0_i32_0 = arith.constant 0 : i32
    %c0_i32_1 = arith.constant 0 : i32
    return %c0_i32, %c0_i32_0 : i32, i32
  }
  func.func @transform_8(%arg0: i32) -> (i32, i32) {
    %c0_i32 = arith.constant 0 : i32
    %c0_i32_0 = arith.constant 0 : i32
    %c0_i32_1 = arith.constant 0 : i32
    return %c0_i32, %c0_i32_0 : i32, i32
  }
  func.func @transform_9(%arg0: i32) -> (i32, i32) {
    %c0_i32 = arith.constant 0 : i32
    %c0_i32_0 = arith.constant 0 : i32
    return %arg0, %c0_i32 : i32, i32
  }
}

</mosaic_0001>

<llo_original>
// kernel: mlp_forward.1
$region0: #{mlp_forward.1}
  #allocation0 [shape = 'u32[]', space=smem, size = 0x4, offset = 0x4, fixed_abs, tag = 'smem constant byte address 0x4 - core index']
  #allocation1 [shape = 'u32[72,128]{1,0:T(1,128)}', space=vmem, size = 0x9000, scoped, tag = 'internal scratch']
  %s0 = inlined_call_operand.hbm [shape: f32[16,32], index: 0, kind: input, shape index: {}]
  %s1 = inlined_call_operand.hbm [shape: bf16[32,256], index: 1, kind: input, shape index: {}]
  %s2 = inlined_call_operand.hbm [shape: f32[1,256], index: 2, kind: input, shape index: {}]
  %s3 = inlined_call_operand.hbm [shape: bf16[256,256], index: 3, kind: input, shape index: {}]
  %s4 = inlined_call_operand.vmem [shape: f32[1,256], index: 4, kind: input, shape index: {}]
  %s5 = inlined_call_operand.hbm [shape: bf16[256,256], index: 5, kind: input, shape index: {}]
  %s6 = inlined_call_operand.vmem [shape: f32[1,256], index: 6, kind: input, shape index: {}]
  %s7 = inlined_call_operand.hbm [shape: bf16[256,128], index: 7, kind: input, shape index: {}]
  %s8 = inlined_call_operand.vmem [shape: f32[1,128], index: 8, kind: input, shape index: {}]
  %s9 = inlined_call_operand.hbm [shape: f32[16,128], index: 9, kind: output, shape index: {}]
  %s10 = sld [smem:[#allocation0]]
  $region70: #{mlp_forward.1} parent=0
    _
  %s12 = ssub.s32 1, %s10
  %s13 = scalar_select 0, %s12, %s10
  $region1: #{mlp_forward.1} parent=0
    #allocation2 [shape = 'u8[8192]{0}', space=vmem, size = 0x2000, scoped, tag = 'input window, operand 0, single buffered']
    #allocation3 [shape = 's32[1]{0}', space=sflag, size = 0x4, scoped, tag = 'scoped memory for mlp_forward.1']
    #allocation4 [shape = 's32[1]{0}', space=sflag, size = 0x4, scoped, tag = 'scoped memory for mlp_forward.1']
    #allocation5 [shape = 'u8[16384]{0}', space=vmem, size = 0x4000, scoped, tag = 'input window, operand 1, single buffered']
    #allocation6 [shape = 's32[1]{0}', space=sflag, size = 0x4, scoped, tag = 'scoped memory for mlp_forward.1']
    #allocation7 [shape = 'u8[1024]{0}', space=vmem, size = 0x400, scoped, tag = 'input window, operand 2, single buffered']
    #allocation8 [shape = 'u8[131072]{0}', space=vmem, size = 0x20000, scoped, tag = 'input window, operand 3, single buffered']
    #allocation9 [shape = 's32[1]{0}', space=sflag, size = 0x4, scoped, tag = 'scoped memory for mlp_forward.1']
    #allocation10 [shape = 'u8[131072]{0}', space=vmem, size = 0x20000, scoped, tag = 'input window, operand 5, single buffered']
    #allocation11 [shape = 'u8[65536]{0}', space=vmem, size = 0x10000, scoped, tag = 'input window, operand 7, single buffered']
    #allocation12 [shape = 's32[1]{0}', space=sflag, size = 0x4, scoped, tag = 'scoped memory for mlp_forward.1']
    #allocation13 [shape = 'u8[8192]{0}', space=vmem, size = 0x2000, scoped, tag = 'output window, operand 0, single buffered']
    %14 = vsyncpa [#allocation3], 0
    %15 = vsyncpa [#allocation6], 0
    %16 = vsyncpa [#allocation9], 0
    %17 = vsyncpa [#allocation12], 0
    %18 = vsyncpa [#allocation4], 0
    // Predicated region
    $region2: #{mlp_forward.1} parent=1 // pred_check
      _
    $region3: #{mlp_forward.1} parent=1 // pred_check_branch
      %20 = sbr.rel (0) target = $region5
    $region4: #{mlp_forward.1} parent=1 // pred_region
      %22 = vsyncadd [#allocation3], 0
      %s23 = sshll.u32 %s0, 4
      %s24 = int_to_ptr.hbm [resolvable:$true] %s23
      %s25 = sshll.u32 [#allocation2], 4
      %s26 = int_to_ptr.vmem [resolvable:$true] %s25
      %31 = dma.hbm_to_vmem [thread:$0]  %s24, 256, %s26, [#allocation3], 128, 128, 8
    $region5: #{mlp_forward.1} parent=1 // pred_fallthru
      _
    // Predicated region
    $region6: #{mlp_forward.1} parent=1 // pred_check
      _
    $region7: #{mlp_forward.1} parent=1 // pred_check_branch
      %33 = sbr.rel (0) target = $region9
    $region8: #{mlp_forward.1} parent=1 // pred_region
      %35 = vsyncadd [#allocation6], 0
      %s36 = sshll.u32 %s1, 4
      %s37 = int_to_ptr.hbm [resolvable:$true] %s36
      %s38 = sshll.u32 [#allocation5], 4
      %s39 = int_to_ptr.vmem [resolvable:$true] %s38
      %44 = dma.hbm_to_vmem [thread:$0]  %s37, 512, %s39, [#allocation6], 128, 128, 8
    $region9: #{mlp_forward.1} parent=1 // pred_fallthru
      _
    // Predicated region
    $region10: #{mlp_forward.1} parent=1 // pred_check
      _
    $region11: #{mlp_forward.1} parent=1 // pred_check_branch
      %46 = sbr.rel (0) target = $region13
    $region12: #{mlp_forward.1} parent=1 // pred_region
      %48 = vsyncadd [#allocation6], 0
      %s50 = sshll.u32 %s2, 4
      %s51 = int_to_ptr.hbm [resolvable:$true] %s50
      %s52 = sshll.u32 [#allocation7], 4
      %s53 = int_to_ptr.vmem [resolvable:$true] %s52
      %55 = dma.hbm_to_vmem [thread:$0]  %s51, 32, %s53, [#allocation6]
    $region13: #{mlp_forward.1} parent=1 // pred_fallthru
      _
    // Predicated region
    $region14: #{mlp_forward.1} parent=1 // pred_check
      _
    $region15: #{mlp_forward.1} parent=1 // pred_check_branch
      %57 = sbr.rel (0) target = $region17
    $region16: #{mlp_forward.1} parent=1 // pred_region
      %59 = vsyncadd [#allocation9], 0
      %s60 = sshll.u32 %s3, 4
      %s61 = int_to_ptr.hbm [resolvable:$true] %s60
      %s62 = sshll.u32 [#allocation8], 4
      %s63 = int_to_ptr.vmem [resolvable:$true] %s62
      %68 = dma.hbm_to_vmem [thread:$0]  %s61, 4096, %s63, [#allocation9], 128, 128, 8
    $region17: #{mlp_forward.1} parent=1 // pred_fallthru
      _
    // Predicated region
    $region18: #{mlp_forward.1} parent=1 // pred_check
      _
    $region19: #{mlp_forward.1} parent=1 // pred_check_branch
      %70 = sbr.rel (0) target = $region21
    $region20: #{mlp_forward.1} parent=1 // pred_region
      _
    $region21: #{mlp_forward.1} parent=1 // pred_fallthru
      _
    // Predicated region
    $region22: #{mlp_forward.1} parent=1 // pred_check
      _
    $region23: #{mlp_forward.1} parent=1 // pred_check_branch
      %72 = sbr.rel (0) target = $region25
    $region24: #{mlp_forward.1} parent=1 // pred_region
      %74 = vsyncadd [#allocation9], 0
      %s75 = sshll.u32 %s5, 4
      %s76 = int_to_ptr.hbm [resolvable:$true] %s75
      %s77 = sshll.u32 [#allocation10], 4
      %s78 = int_to_ptr.vmem [resolvable:$true] %s77
      %83 = dma.hbm_to_vmem [thread:$0]  %s76, 4096, %s78, [#allocation9], 128, 128, 8
    $region25: #{mlp_forward.1} parent=1 // pred_fallthru
      _
    // Predicated region
    $region26: #{mlp_forward.1} parent=1 // pred_check
      _
    $region27: #{mlp_forward.1} parent=1 // pred_check_branch
      %85 = sbr.rel (0) target = $region29
    $region28: #{mlp_forward.1} parent=1 // pred_region
      _
    $region29: #{mlp_forward.1} parent=1 // pred_fallthru
      _
    // Predicated region
    $region30: #{mlp_forward.1} parent=1 // pred_check
      _
    $region31: #{mlp_forward.1} parent=1 // pred_check_branch
      %87 = sbr.rel (0) target = $region33
    $region32: #{mlp_forward.1} parent=1 // pred_region
      %89 = vsyncadd [#allocation12], 0
      %s90 = sshll.u32 %s7, 4
      %s91 = int_to_ptr.hbm [resolvable:$true] %s90
      %s92 = sshll.u32 [#allocation11], 4
      %s93 = int_to_ptr.vmem [resolvable:$true] %s92
      %98 = dma.hbm_to_vmem [thread:$0]  %s91, 2048, %s93, [#allocation12], 64, 64, 4
    $region33: #{mlp_forward.1} parent=1 // pred_fallthru
      _
    // Predicated region
    $region34: #{mlp_forward.1} parent=1 // pred_check
      _
    $region35: #{mlp_forward.1} parent=1 // pred_check_branch
      %100 = sbr.rel (0) target = $region37
    $region36: #{mlp_forward.1} parent=1 // pred_region
      _
    $region37: #{mlp_forward.1} parent=1 // pred_fallthru
      _
    // Predicated region
    $region38: #{mlp_forward.1} parent=1 // pred_check
      _
    $region39: #{mlp_forward.1} parent=1 // pred_check_branch
      %102 = sbr.rel (0) target = $region41
    $region40: #{mlp_forward.1} parent=1 // pred_region
      %104 = dma.done [#allocation3], 256
    $region41: #{mlp_forward.1} parent=1 // pred_fallthru
      _
    // Predicated region
    $region42: #{mlp_forward.1} parent=1 // pred_check
      _
    $region43: #{mlp_forward.1} parent=1 // pred_check_branch
      %106 = sbr.rel (0) target = $region45
    $region44: #{mlp_forward.1} parent=1 // pred_region
      %108 = dma.done [#allocation6], 512
    $region45: #{mlp_forward.1} parent=1 // pred_fallthru
      _
    // Predicated region
    $region46: #{mlp_forward.1} parent=1 // pred_check
      _
    $region47: #{mlp_forward.1} parent=1 // pred_check_branch
      %110 = sbr.rel (0) target = $region49
    $region48: #{mlp_forward.1} parent=1 // pred_region
      %112 = dma.done [#allocation6], 32
    $region49: #{mlp_forward.1} parent=1 // pred_fallthru
      _
    // Predicated region
    $region50: #{mlp_forward.1} parent=1 // pred_check
      _
    $region51: #{mlp_forward.1} parent=1 // pred_check_branch
      %114 = sbr.rel (0) target = $region53
    $region52: #{mlp_forward.1} parent=1 // pred_region
      %116 = dma.done [#allocation9], 4096
    $region53: #{mlp_forward.1} parent=1 // pred_fallthru
      _
    // Predicated region
    $region54: #{mlp_forward.1} parent=1 // pred_check
      _
    $region55: #{mlp_forward.1} parent=1 // pred_check_branch
      %118 = sbr.rel (0) target = $region57
    $region56: #{mlp_forward.1} parent=1 // pred_region
      %120 = dma.done [#allocation9], 4096
    $region57: #{mlp_forward.1} parent=1 // pred_fallthru
      _
    // Predicated region
    $region58: #{mlp_forward.1} parent=1 // pred_check
      _
    $region59: #{mlp_forward.1} parent=1 // pred_check_branch
      %122 = sbr.rel (0) target = $region61
    $region60: #{mlp_forward.1} parent=1 // pred_region
      %124 = dma.done [#allocation12], 2048
    $region61: #{mlp_forward.1} parent=1 // pred_fallthru
      _
    %v126 = vld [vmem:[#allocation2] sm:$0xff]
    %v127 = vld [vmem:[#allocation2 + $0x8] sm:$0xff]
    %v128 = vpack.c.bf16 %v127, %v126
    %v129 = vld [vmem:[#allocation5] sm:$0xff]
    %v130 = vld [vmem:[#allocation5 + $0x8] sm:$0xff]
    %v131 = vld [vmem:[#allocation5 + $0x10] sm:$0xff]
    %v132 = vld [vmem:[#allocation5 + $0x18] sm:$0xff]
    %v133 = vld [vmem:[#allocation7] sm:$0x3]
    %v135 = vperm.slane %v133, 0
    %v136 = vperm.slane %v133, 1
    %v143 = vunpack.c.l.b16 %v129
    %v144 = vunpack.c.h.b16 %v129
    %v145 = vunpack.c.l.b16 %v130
    %v146 = vunpack.c.h.b16 %v130
    %v147 = vunpack.c.l.b16 %v131
    %v148 = vunpack.c.h.b16 %v131
    %v149 = vunpack.c.l.b16 %v132
    %v150 = vunpack.c.h.b16 %v132
    %v151 = vpack.c.b16 %v145, %v143
    %v152 = vpack.c.b16 %v146, %v144
    %v153 = vpack.c.b16 %v149, %v147
    %v154 = vpack.c.b16 %v150, %v148
    %vm159 = vcmask 261120
    %v161 = vsel %vm159, %v128, 0
    %163 = vmatpush.bf16.msra.mxu0 0
    %164 = vmatpush.bf16.msra.mxu0 0
    %165 = vmatpush.bf16.msra.mxu0 0
    %166 = vmatpush.bf16.msra.mxu0 0
    %167 = vmatpush.bf16.msra.mxu0 0
    %168 = vmatpush.bf16.msra.mxu0 0
    %169 = vmatpush.bf16.msra.mxu0 %v153
    %170 = vmatpush.bf16.msra.mxu0 %v151
    %171 = vmatmul.bf16.gmra.mxu0 %v161
    %v172 = vpop.f32.mrf.mxu0
    %v173 = vadd.f32 %v135, %v172
    %v174 = vpop.f32.mrf.mxu0
    %v175 = vadd.f32 %v135, %v174
    %176 = vdwg.mxu0
    %177 = vmatpush.bf16.msra.mxu0 0
    %178 = vmatpush.bf16.msra.mxu0 0
    %179 = vmatpush.bf16.msra.mxu0 0
    %180 = vmatpush.bf16.msra.mxu0 0
    %181 = vmatpush.bf16.msra.mxu0 0
    %182 = vmatpush.bf16.msra.mxu0 0
    %183 = vmatpush.bf16.msra.mxu0 %v154
    %184 = vmatpush.bf16.msra.mxu0 %v152
    %185 = vmatmul.bf16.gmra.mxu0 %v161
    %v186 = vpop.f32.mrf.mxu0
    %v187 = vadd.f32 %v136, %v186
    %v188 = vpop.f32.mrf.mxu0
    %v189 = vadd.f32 %v136, %v188
    %190 = vdwg.mxu0
    %v191 = vmax.f32 %v173, 0.0
    %v192 = vmax.f32 %v187, 0.0
    %v193 = vmax.f32 %v175, 0.0
    %v194 = vmax.f32 %v189, 0.0
    %v195 = vpack.c.bf16 %v193, %v191
    %v196 = vpack.c.bf16 %v194, %v192
    %v197 = vld [vmem:[#allocation8] sm:$0xff]
    %v198 = vld [vmem:[#allocation8 + $0x8] sm:$0xff]
    %v199 = vld [vmem:[#allocation8 + $0x10] sm:$0xff]
    %v200 = vld [vmem:[#allocation8 + $0x18] sm:$0xff]
    %v201 = vld [vmem:[#allocation8 + $0x20] sm:$0xff]
    %v202 = vld [vmem:[#allocation8 + $0x28] sm:$0xff]
    %v203 = vld [vmem:[#allocation8 + $0x30] sm:$0xff]
    %v204 = vld [vmem:[#allocation8 + $0x38] sm:$0xff]
    %v205 = vld [vmem:[#allocation8 + $0x40] sm:$0xff]
    %v206 = vld [vmem:[#allocation8 + $0x48] sm:$0xff]
    %v207 = vld [vmem:[#allocation8 + $0x50] sm:$0xff]
    %v208 = vld [vmem:[#allocation8 + $0x58] sm:$0xff]
    %v209 = vld [vmem:[#allocation8 + $0x60] sm:$0xff]
    %v210 = vld [vmem:[#allocation8 + $0x68] sm:$0xff]
    %v211 = vld [vmem:[#allocation8 + $0x70] sm:$0xff]
    %v212 = vld [vmem:[#allocation8 + $0x78] sm:$0xff]
    %v213 = vld [vmem:[#allocation8 + $0x80] sm:$0xff]
    %v214 = vld [vmem:[#allocation8 + $0x88] sm:$0xff]
    %v215 = vld [vmem:[#allocation8 + $0x90] sm:$0xff]
    %v216 = vld [vmem:[#allocation8 + $0x98] sm:$0xff]
    %v217 = vld [vmem:[#allocation8 + $0xa0] sm:$0xff]
    %v218 = vld [vmem:[#allocation8 + $0xa8] sm:$0xff]
    %v219 = vld [vmem:[#allocation8 + $0xb0] sm:$0xff]
    %v220 = vld [vmem:[#allocation8 + $0xb8] sm:$0xff]
    %v221 = vld [vmem:[#allocation8 + $0xc0] sm:$0xff]
    %v222 = vld [vmem:[#allocation8 + $0xc8] sm:$0xff]
    %v223 = vld [vmem:[#allocation8 + $0xd0] sm:$0xff]
    %v224 = vld [vmem:[#allocation8 + $0xd8] sm:$0xff]
    %v225 = vld [vmem:[#allocation8 + $0xe0] sm:$0xff]
    %v226 = vld [vmem:[#allocation8 + $0xe8] sm:$0xff]
    %v227 = vld [vmem:[#allocation8 + $0xf0] sm:$0xff]
    %v228 = vld [vmem:[#allocation8 + $0xf8] sm:$0xff]
    %v229 = vld [vmem:[%s4] sm:$0x3]
    %v231 = vperm.slane %v229, 0
    %v232 = vperm.slane %v229, 1
    %v267 = vunpack.c.l.b16 %v197
    %v268 = vunpack.c.h.b16 %v197
    %v269 = vunpack.c.l.b16 %v198
    %v270 = vunpack.c.h.b16 %v198
    %v271 = vunpack.c.l.b16 %v199
    %v272 = vunpack.c.h.b16 %v199
    %v273 = vunpack.c.l.b16 %v200
    %v274 = vunpack.c.h.b16 %v200
    %v275 = vunpack.c.l.b16 %v201
    %v276 = vunpack.c.h.b16 %v201
    %v277 = vunpack.c.l.b16 %v202
    %v278 = vunpack.c.h.b16 %v202
    %v279 = vunpack.c.l.b16 %v203
    %v280 = vunpack.c.h.b16 %v203
    %v281 = vunpack.c.l.b16 %v204
    %v282 = vunpack.c.h.b16 %v204
    %v283 = vunpack.c.l.b16 %v205
    %v284 = vunpack.c.h.b16 %v205
    %v285 = vunpack.c.l.b16 %v206
    %v286 = vunpack.c.h.b16 %v206
    %v287 = vunpack.c.l.b16 %v207
    %v288 = vunpack.c.h.b16 %v207
    %v289 = vunpack.c.l.b16 %v208
    %v290 = vunpack.c.h.b16 %v208
    %v291 = vunpack.c.l.b16 %v209
    %v292 = vunpack.c.h.b16 %v209
    %v293 = vunpack.c.l.b16 %v210
    %v294 = vunpack.c.h.b16 %v210
    %v295 = vunpack.c.l.b16 %v211
    %v296 = vunpack.c.h.b16 %v211
    %v297 = vunpack.c.l.b16 %v212
    %v298 = vunpack.c.h.b16 %v212
    %v299 = vunpack.c.l.b16 %v213
    %v300 = vunpack.c.h.b16 %v213
    %v301 = vunpack.c.l.b16 %v214
    %v302 = vunpack.c.h.b16 %v214
    %v303 = vunpack.c.l.b16 %v215
    %v304 = vunpack.c.h.b16 %v215
    %v305 = vunpack.c.l.b16 %v216
    %v306 = vunpack.c.h.b16 %v216
    %v307 = vunpack.c.l.b16 %v217
    %v308 = vunpack.c.h.b16 %v217
    %v309 = vunpack.c.l.b16 %v218
    %v310 = vunpack.c.h.b16 %v218
    %v311 = vunpack.c.l.b16 %v219
    %v312 = vunpack.c.h.b16 %v219
    %v313 = vunpack.c.l.b16 %v220
    %v314 = vunpack.c.h.b16 %v220
    %v315 = vunpack.c.l.b16 %v221
    %v316 = vunpack.c.h.b16 %v221
    %v317 = vunpack.c.l.b16 %v222
    %v318 = vunpack.c.h.b16 %v222
    %v319 = vunpack.c.l.b16 %v223
    %v320 = vunpack.c.h.b16 %v223
    %v321 = vunpack.c.l.b16 %v224
    %v322 = vunpack.c.h.b16 %v224
    %v323 = vunpack.c.l.b16 %v225
    %v324 = vunpack.c.h.b16 %v225
    %v325 = vunpack.c.l.b16 %v226
    %v326 = vunpack.c.h.b16 %v226
    %v327 = vunpack.c.l.b16 %v227
    %v328 = vunpack.c.h.b16 %v227
    %v329 = vunpack.c.l.b16 %v228
    %v330 = vunpack.c.h.b16 %v228
    %v331 = vpack.c.b16 %v269, %v267
    %v332 = vpack.c.b16 %v270, %v268
    %v333 = vpack.c.b16 %v273, %v271
    %v334 = vpack.c.b16 %v274, %v272
    %v335 = vpack.c.b16 %v277, %v275
    %v336 = vpack.c.b16 %v278, %v276
    %v337 = vpack.c.b16 %v281, %v279
    %v338 = vpack.c.b16 %v282, %v280
    %v339 = vpack.c.b16 %v285, %v283
    %v340 = vpack.c.b16 %v286, %v284
    %v341 = vpack.c.b16 %v289, %v287
    %v342 = vpack.c.b16 %v290, %v288
    %v343 = vpack.c.b16 %v293, %v291
    %v344 = vpack.c.b16 %v294, %v292
    %v345 = vpack.c.b16 %v297, %v295
    %v346 = vpack.c.b16 %v298, %v296
    %v347 = vpack.c.b16 %v301, %v299
    %v348 = vpack.c.b16 %v302, %v300
    %v349 = vpack.c.b16 %v305, %v303
    %v350 = vpack.c.b16 %v306, %v304
    %v351 = vpack.c.b16 %v309, %v307
    %v352 = vpack.c.b16 %v310, %v308
    %v353 = vpack.c.b16 %v313, %v311
    %v354 = vpack.c.b16 %v314, %v312
    %v355 = vpack.c.b16 %v317, %v315
    %v356 = vpack.c.b16 %v318, %v316
    %v357 = vpack.c.b16 %v321, %v319
    %v358 = vpack.c.b16 %v322, %v320
    %v359 = vpack.c.b16 %v325, %v323
    %v360 = vpack.c.b16 %v326, %v324
    %v361 = vpack.c.b16 %v329, %v327
    %v362 = vpack.c.b16 %v330, %v328
    %395 = vmatpush.bf16.msra.mxu0 %v345
    %396 = vmatpush.bf16.msra.mxu0 %v343
    %397 = vmatpush.bf16.msra.mxu0 %v341
    %398 = vmatpush.bf16.msra.mxu0 %v339
    %399 = vmatpush.bf16.msra.mxu0 %v337
    %400 = vmatpush.bf16.msra.mxu0 %v335
    %401 = vmatpush.bf16.msra.mxu0 %v333
    %402 = vmatpush.bf16.msra.mxu0 %v331
    %403 = vmatmul.bf16.gmra.mxu0 %v195
    %v404 = vpop.f32.mrf.mxu0
    %v405 = vadd.f32 %v231, %v404
    %v406 = vpop.f32.mrf.mxu0
    %v407 = vadd.f32 %v231, %v406
    %408 = vdwg.mxu0
    %409 = vmatpush.bf16.msra.mxu0 %v361
    %410 = vmatpush.bf16.msra.mxu0 %v359
    %411 = vmatpush.bf16.msra.mxu0 %v357
    %412 = vmatpush.bf16.msra.mxu0 %v355
    %413 = vmatpush.bf16.msra.mxu0 %v353
    %414 = vmatpush.bf16.msra.mxu0 %v351
    %415 = vmatpush.bf16.msra.mxu0 %v349
    %416 = vmatpush.bf16.msra.mxu0 %v347
    %417 = vmatmul.bf16.gmra.mxu0 %v196
    %v418 = vpop.f32.mrf.mxu0
    %v419 = vadd.f32 %v405, %v418
    %v420 = vpop.f32.mrf.mxu0
    %v421 = vadd.f32 %v407, %v420
    %422 = vdwg.mxu0
    %423 = vmatpush.bf16.msra.mxu0 %v346
    %424 = vmatpush.bf16.msra.mxu0 %v344
    %425 = vmatpush.bf16.msra.mxu0 %v342
    %426 = vmatpush.bf16.msra.mxu0 %v340
    %427 = vmatpush.bf16.msra.mxu0 %v338
    %428 = vmatpush.bf16.msra.mxu0 %v336
    %429 = vmatpush.bf16.msra.mxu0 %v334
    %430 = vmatpush.bf16.msra.mxu0 %v332
    %431 = vmatmul.bf16.gmra.mxu0 %v195
    %v432 = vpop.f32.mrf.mxu0
    %v433 = vadd.f32 %v232, %v432
    %v434 = vpop.f32.mrf.mxu0
    %v435 = vadd.f32 %v232, %v434
    %436 = vdwg.mxu0
    %437 = vmatpush.bf16.msra.mxu0 %v362
    %438 = vmatpush.bf16.msra.mxu0 %v360
    %439 = vmatpush.bf16.msra.mxu0 %v358
    %440 = vmatpush.bf16.msra.mxu0 %v356
    %441 = vmatpush.bf16.msra.mxu0 %v354
    %442 = vmatpush.bf16.msra.mxu0 %v352
    %443 = vmatpush.bf16.msra.mxu0 %v350
    %444 = vmatpush.bf16.msra.mxu0 %v348
    %445 = vmatmul.bf16.gmra.mxu0 %v196
    %v446 = vpop.f32.mrf.mxu0
    %v447 = vadd.f32 %v433, %v446
    %v448 = vpop.f32.mrf.mxu0
    %v449 = vadd.f32 %v435, %v448
    %450 = vdwg.mxu0
    %v451 = vmax.f32 %v419, 0.0
    %v452 = vmax.f32 %v447, 0.0
    %v453 = vmax.f32 %v421, 0.0
    %v454 = vmax.f32 %v449, 0.0
    %v455 = vpack.c.bf16 %v453, %v451
    %v456 = vpack.c.bf16 %v454, %v452
    %v457 = vld [vmem:[#allocation10] sm:$0xff]
    %v458 = vld [vmem:[#allocation10 + $0x8] sm:$0xff]
    %v459 = vld [vmem:[#allocation10 + $0x10] sm:$0xff]
    %v460 = vld [vmem:[#allocation10 + $0x18] sm:$0xff]
    %v461 = vld [vmem:[#allocation10 + $0x20] sm:$0xff]
    %v462 = vld [vmem:[#allocation10 + $0x28] sm:$0xff]
    %v463 = vld [vmem:[#allocation10 + $0x30] sm:$0xff]
    %v464 = vld [vmem:[#allocation10 + $0x38] sm:$0xff]
    %v465 = vld [vmem:[#allocation10 + $0x40] sm:$0xff]
    %v466 = vld [vmem:[#allocation10 + $0x48] sm:$0xff]
    %v467 = vld [vmem:[#allocation10 + $0x50] sm:$0xff]
    %v468 = vld [vmem:[#allocation10 + $0x58] sm:$0xff]
    %v469 = vld [vmem:[#allocation10 + $0x60] sm:$0xff]
    %v470 = vld [vmem:[#allocation10 + $0x68] sm:$0xff]
    %v471 = vld [vmem:[#allocation10 + $0x70] sm:$0xff]
    %v472 = vld [vmem:[#allocation10 + $0x78] sm:$0xff]
    %v473 = vld [vmem:[#allocation10 + $0x80] sm:$0xff]
    %v474 = vld [vmem:[#allocation10 + $0x88] sm:$0xff]
    %v475 = vld [vmem:[#allocation10 + $0x90] sm:$0xff]
    %v476 = vld [vmem:[#allocation10 + $0x98] sm:$0xff]
    %v477 = vld [vmem:[#allocation10 + $0xa0] sm:$0xff]
    %v478 = vld [vmem:[#allocation10 + $0xa8] sm:$0xff]
    %v479 = vld [vmem:[#allocation10 + $0xb0] sm:$0xff]
    %v480 = vld [vmem:[#allocation10 + $0xb8] sm:$0xff]
    %v481 = vld [vmem:[#allocation10 + $0xc0] sm:$0xff]
    %v482 = vld [vmem:[#allocation10 + $0xc8] sm:$0xff]
    %v483 = vld [vmem:[#allocation10 + $0xd0] sm:$0xff]
    %v484 = vld [vmem:[#allocation10 + $0xd8] sm:$0xff]
    %v485 = vld [vmem:[#allocation10 + $0xe0] sm:$0xff]
    %v486 = vld [vmem:[#allocation10 + $0xe8] sm:$0xff]
    %v487 = vld [vmem:[#allocation10 + $0xf0] sm:$0xff]
    %v488 = vld [vmem:[#allocation10 + $0xf8] sm:$0xff]
    %v489 = vld [vmem:[%s6] sm:$0x3]
    %v491 = vperm.slane %v489, 0
    %v492 = vperm.slane %v489, 1
    %v527 = vunpack.c.l.b16 %v457
    %v528 = vunpack.c.h.b16 %v457
    %v529 = vunpack.c.l.b16 %v458
    %v530 = vunpack.c.h.b16 %v458
    %v531 = vunpack.c.l.b16 %v459
    %v532 = vunpack.c.h.b16 %v459
    %v533 = vunpack.c.l.b16 %v460
    %v534 = vunpack.c.h.b16 %v460
    %v535 = vunpack.c.l.b16 %v461
    %v536 = vunpack.c.h.b16 %v461
    %v537 = vunpack.c.l.b16 %v462
    %v538 = vunpack.c.h.b16 %v462
    %v539 = vunpack.c.l.b16 %v463
    %v540 = vunpack.c.h.b16 %v463
    %v541 = vunpack.c.l.b16 %v464
    %v542 = vunpack.c.h.b16 %v464
    %v543 = vunpack.c.l.b16 %v465
    %v544 = vunpack.c.h.b16 %v465
    %v545 = vunpack.c.l.b16 %v466
    %v546 = vunpack.c.h.b16 %v466
    %v547 = vunpack.c.l.b16 %v467
    %v548 = vunpack.c.h.b16 %v467
    %v549 = vunpack.c.l.b16 %v468
    %v550 = vunpack.c.h.b16 %v468
    %v551 = vunpack.c.l.b16 %v469
    %v552 = vunpack.c.h.b16 %v469
    %v553 = vunpack.c.l.b16 %v470
    %v554 = vunpack.c.h.b16 %v470
    %v555 = vunpack.c.l.b16 %v471
    %v556 = vunpack.c.h.b16 %v471
    %v557 = vunpack.c.l.b16 %v472
    %v558 = vunpack.c.h.b16 %v472
    %v559 = vunpack.c.l.b16 %v473
    %v560 = vunpack.c.h.b16 %v473
    %v561 = vunpack.c.l.b16 %v474
    %v562 = vunpack.c.h.b16 %v474
    %v563 = vunpack.c.l.b16 %v475
    %v564 = vunpack.c.h.b16 %v475
    %v565 = vunpack.c.l.b16 %v476
    %v566 = vunpack.c.h.b16 %v476
    %v567 = vunpack.c.l.b16 %v477
    %v568 = vunpack.c.h.b16 %v477
    %v569 = vunpack.c.l.b16 %v478
    %v570 = vunpack.c.h.b16 %v478
    %v571 = vunpack.c.l.b16 %v479
    %v572 = vunpack.c.h.b16 %v479
    %v573 = vunpack.c.l.b16 %v480
    %v574 = vunpack.c.h.b16 %v480
    %v575 = vunpack.c.l.b16 %v481
    %v576 = vunpack.c.h.b16 %v481
    %v577 = vunpack.c.l.b16 %v482
    %v578 = vunpack.c.h.b16 %v482
    %v579 = vunpack.c.l.b16 %v483
    %v580 = vunpack.c.h.b16 %v483
    %v581 = vunpack.c.l.b16 %v484
    %v582 = vunpack.c.h.b16 %v484
    %v583 = vunpack.c.l.b16 %v485
    %v584 = vunpack.c.h.b16 %v485
    %v585 = vunpack.c.l.b16 %v486
    %v586 = vunpack.c.h.b16 %v486
    %v587 = vunpack.c.l.b16 %v487
    %v588 = vunpack.c.h.b16 %v487
    %v589 = vunpack.c.l.b16 %v488
    %v590 = vunpack.c.h.b16 %v488
    %v591 = vpack.c.b16 %v529, %v527
    %v592 = vpack.c.b16 %v530, %v528
    %v593 = vpack.c.b16 %v533, %v531
    %v594 = vpack.c.b16 %v534, %v532
    %v595 = vpack.c.b16 %v537, %v535
    %v596 = vpack.c.b16 %v538, %v536
    %v597 = vpack.c.b16 %v541, %v539
    %v598 = vpack.c.b16 %v542, %v540
    %v599 = vpack.c.b16 %v545, %v543
    %v600 = vpack.c.b16 %v546, %v544
    %v601 = vpack.c.b16 %v549, %v547
    %v602 = vpack.c.b16 %v550, %v548
    %v603 = vpack.c.b16 %v553, %v551
    %v604 = vpack.c.b16 %v554, %v552
    %v605 = vpack.c.b16 %v557, %v555
    %v606 = vpack.c.b16 %v558, %v556
    %v607 = vpack.c.b16 %v561, %v559
    %v608 = vpack.c.b16 %v562, %v560
    %v609 = vpack.c.b16 %v565, %v563
    %v610 = vpack.c.b16 %v566, %v564
    %v611 = vpack.c.b16 %v569, %v567
    %v612 = vpack.c.b16 %v570, %v568
    %v613 = vpack.c.b16 %v573, %v571
    %v614 = vpack.c.b16 %v574, %v572
    %v615 = vpack.c.b16 %v577, %v575
    %v616 = vpack.c.b16 %v578, %v576
    %v617 = vpack.c.b16 %v581, %v579
    %v618 = vpack.c.b16 %v582, %v580
    %v619 = vpack.c.b16 %v585, %v583
    %v620 = vpack.c.b16 %v586, %v584
    %v621 = vpack.c.b16 %v589, %v587
    %v622 = vpack.c.b16 %v590, %v588
    %655 = vmatpush.bf16.msra.mxu0 %v605
    %656 = vmatpush.bf16.msra.mxu0 %v603
    %657 = vmatpush.bf16.msra.mxu0 %v601
    %658 = vmatpush.bf16.msra.mxu0 %v599
    %659 = vmatpush.bf16.msra.mxu0 %v597
    %660 = vmatpush.bf16.msra.mxu0 %v595
    %661 = vmatpush.bf16.msra.mxu0 %v593
    %662 = vmatpush.bf16.msra.mxu0 %v591
    %663 = vmatmul.bf16.gmra.mxu0 %v455
    %v664 = vpop.f32.mrf.mxu0
    %v665 = vadd.f32 %v491, %v664
    %v666 = vpop.f32.mrf.mxu0
    %v667 = vadd.f32 %v491, %v666
    %668 = vdwg.mxu0
    %669 = vmatpush.bf16.msra.mxu0 %v621
    %670 = vmatpush.bf16.msra.mxu0 %v619
    %671 = vmatpush.bf16.msra.mxu0 %v617
    %672 = vmatpush.bf16.msra.mxu0 %v615
    %673 = vmatpush.bf16.msra.mxu0 %v613
    %674 = vmatpush.bf16.msra.mxu0 %v611
    %675 = vmatpush.bf16.msra.mxu0 %v609
    %676 = vmatpush.bf16.msra.mxu0 %v607
    %677 = vmatmul.bf16.gmra.mxu0 %v456
    %v678 = vpop.f32.mrf.mxu0
    %v679 = vadd.f32 %v665, %v678
    %v680 = vpop.f32.mrf.mxu0
    %v681 = vadd.f32 %v667, %v680
    %682 = vdwg.mxu0
    %683 = vmatpush.bf16.msra.mxu0 %v606
    %684 = vmatpush.bf16.msra.mxu0 %v604
    %685 = vmatpush.bf16.msra.mxu0 %v602
    %686 = vmatpush.bf16.msra.mxu0 %v600
    %687 = vmatpush.bf16.msra.mxu0 %v598
    %688 = vmatpush.bf16.msra.mxu0 %v596
    %689 = vmatpush.bf16.msra.mxu0 %v594
    %690 = vmatpush.bf16.msra.mxu0 %v592
    %691 = vmatmul.bf16.gmra.mxu0 %v455
    %v692 = vpop.f32.mrf.mxu0
    %v693 = vadd.f32 %v492, %v692
    %v694 = vpop.f32.mrf.mxu0
    %v695 = vadd.f32 %v492, %v694
    %696 = vdwg.mxu0
    %697 = vmatpush.bf16.msra.mxu0 %v622
    %698 = vmatpush.bf16.msra.mxu0 %v620
    %699 = vmatpush.bf16.msra.mxu0 %v618
    %700 = vmatpush.bf16.msra.mxu0 %v616
    %701 = vmatpush.bf16.msra.mxu0 %v614
    %702 = vmatpush.bf16.msra.mxu0 %v612
    %703 = vmatpush.bf16.msra.mxu0 %v610
    %704 = vmatpush.bf16.msra.mxu0 %v608
    %705 = vmatmul.bf16.gmra.mxu0 %v456
    %v706 = vpop.f32.mrf.mxu0
    %v707 = vadd.f32 %v693, %v706
    %v708 = vpop.f32.mrf.mxu0
    %v709 = vadd.f32 %v695, %v708
    %710 = vdwg.mxu0
    %v711 = vmax.f32 %v679, 0.0
    %v712 = vmax.f32 %v707, 0.0
    %v713 = vmax.f32 %v681, 0.0
    %v714 = vmax.f32 %v709, 0.0
    %v715 = vpack.c.bf16 %v713, %v711
    %v716 = vpack.c.bf16 %v714, %v712
    %v717 = vld [vmem:[#allocation11] sm:$0xf]
    %v718 = vld [vmem:[#allocation11 + $0x4] sm:$0xf]
    %v719 = vld [vmem:[#allocation11 + $0x8] sm:$0xf]
    %v720 = vld [vmem:[#allocation11 + $0xc] sm:$0xf]
    %v721 = vld [vmem:[#allocation11 + $0x10] sm:$0xf]
    %v722 = vld [vmem:[#allocation11 + $0x14] sm:$0xf]
    %v723 = vld [vmem:[#allocation11 + $0x18] sm:$0xf]
    %v724 = vld [vmem:[#allocation11 + $0x1c] sm:$0xf]
    %v725 = vld [vmem:[#allocation11 + $0x20] sm:$0xf]
    %v726 = vld [vmem:[#allocation11 + $0x24] sm:$0xf]
    %v727 = vld [vmem:[#allocation11 + $0x28] sm:$0xf]
    %v728 = vld [vmem:[#allocation11 + $0x2c] sm:$0xf]
    %v729 = vld [vmem:[#allocation11 + $0x30] sm:$0xf]
    %v730 = vld [vmem:[#allocation11 + $0x34] sm:$0xf]
    %v731 = vld [vmem:[#allocation11 + $0x38] sm:$0xf]
    %v732 = vld [vmem:[#allocation11 + $0x3c] sm:$0xf]
    %v733 = vld [vmem:[#allocation11 + $0x40] sm:$0xf]
    %v734 = vld [vmem:[#allocation11 + $0x44] sm:$0xf]
    %v735 = vld [vmem:[#allocation11 + $0x48] sm:$0xf]
    %v736 = vld [vmem:[#allocation11 + $0x4c] sm:$0xf]
    %v737 = vld [vmem:[#allocation11 + $0x50] sm:$0xf]
    %v738 = vld [vmem:[#allocation11 + $0x54] sm:$0xf]
    %v739 = vld [vmem:[#allocation11 + $0x58] sm:$0xf]
    %v740 = vld [vmem:[#allocation11 + $0x5c] sm:$0xf]
    %v741 = vld [vmem:[#allocation11 + $0x60] sm:$0xf]
    %v742 = vld [vmem:[#allocation11 + $0x64] sm:$0xf]
    %v743 = vld [vmem:[#allocation11 + $0x68] sm:$0xf]
    %v744 = vld [vmem:[#allocation11 + $0x6c] sm:$0xf]
    %v745 = vld [vmem:[#allocation11 + $0x70] sm:$0xf]
    %v746 = vld [vmem:[#allocation11 + $0x74] sm:$0xf]
    %v747 = vld [vmem:[#allocation11 + $0x78] sm:$0xf]
    %v748 = vld [vmem:[#allocation11 + $0x7c] sm:$0xf]
    %v749 = vld [vmem:[%s8] sm:$0x1]
    %v751 = vperm.slane %v749, 0
    %v785 = vunpack.c.l.b16 %v717
    %v786 = vunpack.c.l.b16 %v718
    %v787 = vunpack.c.l.b16 %v719
    %v788 = vunpack.c.l.b16 %v720
    %v789 = vunpack.c.l.b16 %v721
    %v790 = vunpack.c.l.b16 %v722
    %v791 = vunpack.c.l.b16 %v723
    %v792 = vunpack.c.l.b16 %v724
    %v793 = vunpack.c.l.b16 %v725
    %v794 = vunpack.c.l.b16 %v726
    %v795 = vunpack.c.l.b16 %v727
    %v796 = vunpack.c.l.b16 %v728
    %v797 = vunpack.c.l.b16 %v729
    %v798 = vunpack.c.l.b16 %v730
    %v799 = vunpack.c.l.b16 %v731
    %v800 = vunpack.c.l.b16 %v732
    %v801 = vunpack.c.l.b16 %v733
    %v802 = vunpack.c.l.b16 %v734
    %v803 = vunpack.c.l.b16 %v735
    %v804 = vunpack.c.l.b16 %v736
    %v805 = vunpack.c.l.b16 %v737
    %v806 = vunpack.c.l.b16 %v738
    %v807 = vunpack.c.l.b16 %v739
    %v808 = vunpack.c.l.b16 %v740
    %v809 = vunpack.c.l.b16 %v741
    %v810 = vunpack.c.l.b16 %v742
    %v811 = vunpack.c.l.b16 %v743
    %v812 = vunpack.c.l.b16 %v744
    %v813 = vunpack.c.l.b16 %v745
    %v814 = vunpack.c.l.b16 %v746
    %v815 = vunpack.c.l.b16 %v747
    %v816 = vunpack.c.l.b16 %v748
    %v817 = vpack.c.b16 %v786, %v785
    %v818 = vpack.c.b16 %v788, %v787
    %v819 = vpack.c.b16 %v790, %v789
    %v820 = vpack.c.b16 %v792, %v791
    %v821 = vpack.c.b16 %v794, %v793
    %v822 = vpack.c.b16 %v796, %v795
    %v823 = vpack.c.b16 %v798, %v797
    %v824 = vpack.c.b16 %v800, %v799
    %v825 = vpack.c.b16 %v802, %v801
    %v826 = vpack.c.b16 %v804, %v803
    %v827 = vpack.c.b16 %v806, %v805
    %v828 = vpack.c.b16 %v808, %v807
    %v829 = vpack.c.b16 %v810, %v809
    %v830 = vpack.c.b16 %v812, %v811
    %v831 = vpack.c.b16 %v814, %v813
    %v832 = vpack.c.b16 %v816, %v815
    %849 = vmatpush.bf16.msra.mxu0 %v824
    %850 = vmatpush.bf16.msra.mxu0 %v823
    %851 = vmatpush.bf16.msra.mxu0 %v822
    %852 = vmatpush.bf16.msra.mxu0 %v821
    %853 = vmatpush.bf16.msra.mxu0 %v820
    %854 = vmatpush.bf16.msra.mxu0 %v819
    %855 = vmatpush.bf16.msra.mxu0 %v818
    %856 = vmatpush.bf16.msra.mxu0 %v817
    %857 = vmatmul.bf16.gmra.mxu0 %v715
    %v858 = vpop.f32.mrf.mxu0
    %v859 = vadd.f32 %v751, %v858
    %v860 = vpop.f32.mrf.mxu0
    %v861 = vadd.f32 %v751, %v860
    %862 = vdwg.mxu0
    %863 = vmatpush.bf16.msra.mxu0 %v832
    %864 = vmatpush.bf16.msra.mxu0 %v831
    %865 = vmatpush.bf16.msra.mxu0 %v830
    %866 = vmatpush.bf16.msra.mxu0 %v829
    %867 = vmatpush.bf16.msra.mxu0 %v828
    %868 = vmatpush.bf16.msra.mxu0 %v827
    %869 = vmatpush.bf16.msra.mxu0 %v826
    %870 = vmatpush.bf16.msra.mxu0 %v825
    %871 = vmatmul.bf16.gmra.mxu0 %v716
    %v872 = vpop.f32.mrf.mxu0
    %v873 = vadd.f32 %v859, %v872
    %v874 = vpop.f32.mrf.mxu0
    %v875 = vadd.f32 %v861, %v874
    %876 = vdwg.mxu0
    %877 = vst [vmem:[#allocation13] sm:$0xff] %v873
    %878 = vst [vmem:[#allocation13 + $0x8] sm:$0xff] %v875
    // Predicated region
    $region62: #{mlp_forward.1} parent=1 // pred_check
      _
    $region63: #{mlp_forward.1} parent=1 // pred_check_branch
      %880 = sbr.rel (0) target = $region65
    $region64: #{mlp_forward.1} parent=1 // pred_region
      %882 = vsyncadd [#allocation4], 0
      %s883 = sshll.u32 [#allocation13], 4
      %s884 = int_to_ptr.vmem [resolvable:$true] %s883
      %s885 = sshll.u32 %s9, 4
      %s886 = int_to_ptr.hbm [resolvable:$true] %s885
      %891 = dma.vmem_to_hbm [thread:$0]  %s884, 256, %s886, [#allocation4], 128, 128, 8
    $region65: #{mlp_forward.1} parent=1 // pred_fallthru
      _
    // Predicated region
    $region66: #{mlp_forward.1} parent=1 // pred_check
      _
    $region67: #{mlp_forward.1} parent=1 // pred_check_branch
      %893 = sbr.rel (0) target = $region69
    $region68: #{mlp_forward.1} parent=1 // pred_region
      %895 = dma.done [#allocation4], 256
    $region69: #{mlp_forward.1} parent=1 // pred_fallthru
      _
    %896 = vsyncpa [#allocation3], 1
    %897 = vsyncpa [#allocation6], 1
    %898 = vsyncpa [#allocation9], 1
    %899 = vsyncpa [#allocation12], 1
    %900 = vsyncpa [#allocation4], 1

</llo_original>
